<compile_context>
chip_gen: v7x
topology: tpu7x:2x2x1
jax: 0.10.0
libtpu: 0.0.40
codegen_flags: <defaults>
</compile_context>

<pallas_src>
import functools

import jax
import jax.numpy as jnp
from jax.experimental import pallas as pl
from jax.experimental.pallas import tpu as pltpu

LANE = 128
SUBLANE = 8
NUM_CORES = 2  # leading "parallel" grid axis (v7x megacore); harmless elsewhere


def _round_up(a, b):
    return ((a + b - 1) // b) * b


def _mse_kernel(x_ref, y_ref, o_ref, *, total_rows, block_rows, blocks_per_core):
    c = pl.program_id(0)          # core shard (parallel axis)
    j = pl.program_id(1)          # block within this core's shard (reduction axis)

    @pl.when(j == 0)
    def _():
        o_ref[...] = jnp.zeros_like(o_ref)

    # Global row offset from the *unclamped* block index; used for tail masking.
    base_row = (c * blocks_per_core + j) * block_rows

    def _accumulate(mask_tail):
        x = x_ref[...].astype(jnp.float32)
        y = y_ref[...].astype(jnp.float32)
        d = x - y
        d2 = d * d
        if mask_tail:
            row = jax.lax.broadcasted_iota(jnp.int32, (block_rows, LANE), 0)
            d2 = jnp.where(base_row + row < total_rows, d2, 0.0)
        # VPU-only partial reduce into a vreg-shaped (8, 128) accumulator held
        # in the resident output block (no per-step cross-lane XLU reduce).
        part = jnp.sum(d2.reshape(block_rows // SUBLANE, SUBLANE, LANE), axis=0)
        o_ref[...] += part[None, :, :]

    in_bounds = base_row + block_rows <= total_rows

    @pl.when(in_bounds)
    def _():
        _accumulate(False)

    @pl.when(jnp.logical_not(in_bounds))
    def _():
        _accumulate(True)


def mse_loss(inputs, targets, *, block_rows=4096):
    """Mean-squared-error with 'mean' reduction, matching torch.nn.MSELoss()."""
    assert inputs.shape == targets.shape, "MSELoss requires matching shapes"
    n = int(inputs.size)

    if inputs.dtype not in (jnp.float32, jnp.bfloat16, jnp.float16):
        inputs = inputs.astype(jnp.float32)
    targets = targets.astype(inputs.dtype)

    x = inputs.reshape(-1)
    y = targets.reshape(-1)

    rows = pl.cdiv(n, LANE)
    pad = rows * LANE - n
    if pad:
        # Only when n isn't a multiple of 128; zero padding contributes 0.
        x = jnp.pad(x, (0, pad))
        y = jnp.pad(y, (0, pad))
    x2 = x.reshape(rows, LANE)
    y2 = y.reshape(rows, LANE)

    # Keep the block a multiple of 32 sublanes (covers f32/bf16/f16 packing) and
    # shrink it for small inputs so we don't burn VPU work on a garbage tail.
    block_rows = max(32, min(int(block_rows), _round_up(rows, 32)))
    total_blocks = pl.cdiv(rows, block_rows)
    blocks_per_core = pl.cdiv(total_blocks, NUM_CORES)

    def in_map(c, j):
        # Phantom blocks past the end of the data are clamped onto the last real
        # block; the kernel masks them to zero using the unclamped index.
        return (jnp.minimum(c * blocks_per_core + j, total_blocks - 1), 0)

    kernel = functools.partial(
        _mse_kernel,
        total_rows=rows,
        block_rows=block_rows,
        blocks_per_core=blocks_per_core,
    )

    partials = pl.pallas_call(
        kernel,
        out_shape=jax.ShapeDtypeStruct((NUM_CORES, SUBLANE, LANE), jnp.float32),
        grid_spec=pltpu.PrefetchScalarGridSpec(
            num_scalar_prefetch=0,
            grid=(NUM_CORES, blocks_per_core),
            in_specs=[
                pl.BlockSpec((block_rows, LANE), in_map),
                pl.BlockSpec((block_rows, LANE), in_map),
            ],
            out_specs=pl.BlockSpec((1, SUBLANE, LANE), lambda c, j: (c, 0, 0)),
        ),
        compiler_params=pltpu.CompilerParams(
            dimension_semantics=("parallel", "arbitrary"),
        ),
    )(x2, y2)

    # Single cheap cross-lane reduce + mean normalization outside the hot loop.
    return jnp.sum(partials) / jnp.float32(n)


if __name__ == "__main__":
    key = jax.random.PRNGKey(0)
    k1, k2, k3, k4, k5, k6 = jax.random.split(key, 6)

    # Primary check: NCHW, matching a typical PyTorch conv-feature input.
    inputs = jax.random.normal(k1, (2, 4, 16, 16), dtype=jnp.float32)
    targets = jax.random.normal(k2, (2, 4, 16, 16), dtype=jnp.float32)
    loss = jax.block_until_ready(mse_loss(inputs, targets))
    ref = jnp.mean((inputs - targets) ** 2)
    assert jnp.allclose(loss, ref, rtol=1e-5, atol=1e-6), (loss, ref)

    # Ragged size (not a multiple of 128) exercises the in-kernel tail mask.
    xr = jax.random.normal(k3, (3, 5, 7, 11), dtype=jnp.float32)
    yr = jax.random.normal(k4, (3, 5, 7, 11), dtype=jnp.float32)
    loss_r = jax.block_until_ready(mse_loss(xr, yr))
    ref_r = jnp.mean((xr - yr) ** 2)
    assert jnp.allclose(loss_r, ref_r, rtol=1e-5, atol=1e-6), (loss_r, ref_r)

    # Multi-block / both-core accumulation path with a small explicit block size.
    xm = jax.random.normal(k5, (2, 4, 64, 64), dtype=jnp.float32)
    ym = jax.random.normal(k6, (2, 4, 64, 64), dtype=jnp.float32)
    loss_m = jax.block_until_ready(mse_loss(xm, ym, block_rows=64))
    ref_m = jnp.mean((xm - ym) ** 2)
    assert jnp.allclose(loss_m, ref_m, rtol=1e-5, atol=1e-6), (loss_m, ref_m)

    print("KERNEL_OK")
</pallas_src>

<mosaic_0001>
module attributes {stable_mosaic.version = 11 : i64} {
  func.func @_mse_kernel(%arg0: i32, %arg1: i32, %arg2: memref<32x128xf32, #tpu.memory_space<vmem>>, %arg3: memref<32x128xf32, #tpu.memory_space<vmem>>, %arg4: memref<1x8x128xf32, #tpu.memory_space<vmem>>) attributes {dimension_semantics = [#tpu.dimension_semantics<parallel>, #tpu.dimension_semantics<arbitrary>], iteration_bounds = array<i64: 2, 1>, scalar_prefetch = 0 : i64, scratch_operands = 0 : i64, tpu.core_type = #tpu.core_type<tc>, window_params = [{transform_indices = @transform_0, window_bounds = array<i64: 32, 128>}, {transform_indices = @transform_1, window_bounds = array<i64: 32, 128>}, {transform_indices = @transform_2, window_bounds = array<i64: 1, 8, 128>}]} {
    %c0_i32 = arith.constant 0 : i32
    %0 = arith.cmpi eq, %arg1, %c0_i32 : i32
    %1 = arith.extui %0 : i1 to i32
    %c0_i32_0 = arith.constant 0 : i32
    %2 = arith.cmpi ne, %1, %c0_i32_0 : i32
    scf.if %2 {
      %cst = arith.constant 0.000000e+00 : f32
      %13 = vector.broadcast %cst : f32 to vector<1x8x128xf32>
      %c0 = arith.constant 0 : index
      %c0_4 = arith.constant 0 : index
      %c0_5 = arith.constant 0 : index
      %14 = vector.load %arg4[%c0, %c0_4, %c0_5] : memref<1x8x128xf32, #tpu.memory_space<vmem>>, vector<1x8x128xf32>
      tpu.vector_store %arg4[%c0, %c0_4, %c0_5], %13 {strides = array<i32>} : memref<1x8x128xf32, #tpu.memory_space<vmem>>, vector<1x8x128xf32>,
    } else {
    }
    %c1_i32 = arith.constant 1 : i32
    %3 = arith.muli %arg0, %c1_i32 : i32
    %4 = arith.addi %3, %arg1 : i32
    %c32_i32 = arith.constant 32 : i32
    %5 = arith.muli %4, %c32_i32 : i32
    %c32_i32_1 = arith.constant 32 : i32
    %6 = arith.addi %5, %c32_i32_1 : i32
    %c16_i32 = arith.constant 16 : i32
    %7 = arith.cmpi sle, %6, %c16_i32 : i32
    %8 = arith.extui %7 : i1 to i32
    %c0_i32_2 = arith.constant 0 : i32
    %9 = arith.cmpi ne, %8, %c0_i32_2 : i32
    scf.if %9 {
      %c0 = arith.constant 0 : index
      %c0_4 = arith.constant 0 : index
      %13 = vector.load %arg2[%c0, %c0_4] : memref<32x128xf32, #tpu.memory_space<vmem>>, vector<32x128xf32>
      %c0_5 = arith.constant 0 : index
      %c0_6 = arith.constant 0 : index
      %14 = vector.load %arg3[%c0_5, %c0_6] : memref<32x128xf32, #tpu.memory_space<vmem>>, vector<32x128xf32>
      %15 = arith.subf %13, %14 : vector<32x128xf32>
      %16 = arith.mulf %15, %15 : vector<32x128xf32>
      %17 = vector.shape_cast %16 : vector<32x128xf32> to vector<4x8x128xf32>
      %cst = arith.constant dense<0.000000e+00> : vector<8x128xf32>
      %18 = vector.multi_reduction <add>, %17, %cst [0] : vector<4x8x128xf32> to vector<8x128xf32>
      %c0_7 = arith.constant 0 : index
      %c0_8 = arith.constant 0 : index
      %c0_9 = arith.constant 0 : index
      %19 = vector.load %arg4[%c0_7, %c0_8, %c0_9] : memref<1x8x128xf32, #tpu.memory_space<vmem>>, vector<1x8x128xf32>
      %20 = vector.shape_cast %18 : vector<8x128xf32> to vector<1x8x128xf32>
      %21 = arith.addf %19, %20 : vector<1x8x128xf32>
      %c0_10 = arith.constant 0 : index
      %c0_11 = arith.constant 0 : index
      %c0_12 = arith.constant 0 : index
      %22 = vector.load %arg4[%c0_10, %c0_11, %c0_12] : memref<1x8x128xf32, #tpu.memory_space<vmem>>, vector<1x8x128xf32>
      tpu.vector_store %arg4[%c0_10, %c0_11, %c0_12], %21 {strides = array<i32>} : memref<1x8x128xf32, #tpu.memory_space<vmem>>, vector<1x8x128xf32>,
    } else {
    }
    %true = arith.constant true
    %10 = arith.xori %7, %true : i1
    %11 = arith.extui %10 : i1 to i32
    %c0_i32_3 = arith.constant 0 : i32
    %12 = arith.cmpi ne, %11, %c0_i32_3 : i32
    scf.if %12 {
      %c0 = arith.constant 0 : index
      %c0_4 = arith.constant 0 : index
      %13 = vector.load %arg2[%c0, %c0_4] : memref<32x128xf32, #tpu.memory_space<vmem>>, vector<32x128xf32>
      %c0_5 = arith.constant 0 : index
      %c0_6 = arith.constant 0 : index
      %14 = vector.load %arg3[%c0_5, %c0_6] : memref<32x128xf32, #tpu.memory_space<vmem>>, vector<32x128xf32>
      %15 = arith.subf %13, %14 : vector<32x128xf32>
      %16 = arith.mulf %15, %15 : vector<32x128xf32>
      %17 = tpu.iota {dimensions = array<i32: 0>} : vector<32x128xi32>
      %18 = vector.broadcast %5 : i32 to vector<32x128xi32>
      %19 = arith.addi %18, %17 : vector<32x128xi32>
      %c16_i32_7 = arith.constant 16 : i32
      %20 = vector.broadcast %c16_i32_7 : i32 to vector<32x128xi32>
      %21 = arith.cmpi slt, %19, %20 : vector<32x128xi32>
      %cst = arith.constant 0.000000e+00 : f32
      %22 = vector.broadcast %cst : f32 to vector<32x128xf32>
      %23 = arith.select %21, %16, %22 : vector<32x128xi1>, vector<32x128xf32>
      %24 = vector.shape_cast %23 : vector<32x128xf32> to vector<4x8x128xf32>
      %cst_8 = arith.constant dense<0.000000e+00> : vector<8x128xf32>
      %25 = vector.multi_reduction <add>, %24, %cst_8 [0] : vector<4x8x128xf32> to vector<8x128xf32>
      %c0_9 = arith.constant 0 : index
      %c0_10 = arith.constant 0 : index
      %c0_11 = arith.constant 0 : index
      %26 = vector.load %arg4[%c0_9, %c0_10, %c0_11] : memref<1x8x128xf32, #tpu.memory_space<vmem>>, vector<1x8x128xf32>
      %27 = vector.shape_cast %25 : vector<8x128xf32> to vector<1x8x128xf32>
      %28 = arith.addf %26, %27 : vector<1x8x128xf32>
      %c0_12 = arith.constant 0 : index
      %c0_13 = arith.constant 0 : index
      %c0_14 = arith.constant 0 : index
      %29 = vector.load %arg4[%c0_12, %c0_13, %c0_14] : memref<1x8x128xf32, #tpu.memory_space<vmem>>, vector<1x8x128xf32>
      tpu.vector_store %arg4[%c0_12, %c0_13, %c0_14], %28 {strides = array<i32>} : memref<1x8x128xf32, #tpu.memory_space<vmem>>, vector<1x8x128xf32>,
    } else {
    }
    return
  }
  func.func @transform_0(%arg0: i32, %arg1: i32) -> (i32, i32) {
    %c1_i32 = arith.constant 1 : i32
    %0 = arith.muli %arg0, %c1_i32 : i32
    %1 = arith.addi %0, %arg1 : i32
    %c0_i32 = arith.constant 0 : i32
    %2 = arith.minsi %1, %c0_i32 : i32
    %c0_i32_0 = arith.constant 0 : i32
    %c0_i32_1 = arith.constant 0 : i32
    return %2, %c0_i32_0 : i32, i32
  }
  func.func @transform_1(%arg0: i32, %arg1: i32) -> (i32, i32) {
    %c1_i32 = arith.constant 1 : i32
    %0 = arith.muli %arg0, %c1_i32 : i32
    %1 = arith.addi %0, %arg1 : i32
    %c0_i32 = arith.constant 0 : i32
    %2 = arith.minsi %1, %c0_i32 : i32
    %c0_i32_0 = arith.constant 0 : i32
    %c0_i32_1 = arith.constant 0 : i32
    return %2, %c0_i32_0 : i32, i32
  }
  func.func @transform_2(%arg0: i32, %arg1: i32) -> (i32, i32, i32) {
    %c0_i32 = arith.constant 0 : i32
    %c0_i32_0 = arith.constant 0 : i32
    %c0_i32_1 = arith.constant 0 : i32
    return %arg0, %c0_i32, %c0_i32_0 : i32, i32, i32
  }
}

</mosaic_0001>

<llo_original>
// kernel: tpu_custom_call.1
$region0: #{tpu_custom_call.1}
  #allocation0 [shape = 'u32[]', space=smem, size = 0x4, offset = 0x4, fixed_abs, tag = 'smem constant byte address 0x4 - core index']
  #allocation1 [shape = 'u32[144,128]{1,0:T(1,128)}', space=vmem, size = 0x12000, scoped, tag = 'internal scratch']
  %s0 = inlined_call_operand.hbm [shape: f32[16,128], index: 0, kind: input, shape index: {}]
  %s1 = inlined_call_operand.hbm [shape: f32[16,128], index: 1, kind: input, shape index: {}]
  %s2 = inlined_call_operand.hbm [shape: f32[2,8,128], index: 2, kind: output, shape index: {}]
  %s3 = sld [smem:[#allocation0]]
  $region61: #{tpu_custom_call.1} parent=0
    _
  %s5 = ssub.s32 1, %s3
  %s6 = scalar_select 0, %s5, %s3
  $region1: #{tpu_custom_call.1} parent=0
    #allocation2 [shape = 'u8[32768]{0}', space=vmem, size = 0x8000, scoped, tag = 'input window, operand 0']
    #allocation3 [shape = 's32[2]{0}', space=sflag, size = 0x8, scoped, tag = 'scoped memory for tpu_custom_call.1']
    #allocation4 [shape = 's32[2]{0}', space=sflag, size = 0x8, scoped, tag = 'scoped memory for tpu_custom_call.1']
    #allocation5 [shape = 'u8[32768]{0}', space=vmem, size = 0x8000, scoped, tag = 'input window, operand 1']
    #allocation6 [shape = 's32[2]{0}', space=sflag, size = 0x8, scoped, tag = 'scoped memory for tpu_custom_call.1']
    #allocation7 [shape = 'u8[8192]{0}', space=vmem, size = 0x2000, scoped, tag = 'output window, operand 0']
    %7 = vsyncpa [#allocation3], 0
    %s8 = scalar_lea.sflag [#allocation3], 1
    %9 = vsyncpa %s8, 0
    %10 = vsyncpa [#allocation6], 0
    %s11 = scalar_lea.sflag [#allocation6], 1
    %12 = vsyncpa %s11, 0
    %13 = vsyncpa [#allocation4], 0
    %s14 = scalar_lea.sflag [#allocation4], 1
    %15 = vsyncpa %s14, 0
    loop: start=0, step=1, limit=4
    $region2: #{tpu_custom_call.1} parent=1 // loop_pre_header
      _
    $region3: #{tpu_custom_call.1} parent=1 // loop_header
      %s17 = sphi 0, %s21
      %p18 = scmp.ge.s32.totalorder %s17, 4
      %s24 = sphi 0, %s36
      %s25 = sphi 0, %s32
      %s26 = sphi 0, %s24
      %s27 = sphi 0, %s25
      %s28 = sphi 0, %s26
      %s29 = sphi 0, %s27
      %s45 = sphi 0, %s47
      %s48 = sphi 0, %s45
      %s49 = sphi 0, %s48
      %s65 = sphi 0, %s49
      %s77 = sphi 0, %s79
      %s80 = sphi 0, %s77
      %s81 = sphi 0, %s80
      %s97 = sphi 0, %s81
      %s103 = sphi 0, %s105
      %s106 = sphi 0, %s103
      %s107 = sphi 0, %s106
      %s123 = sphi 0, %s107
    $region4: #{tpu_custom_call.1} parent=1 // loop_header_branch
      %20 = sbr.rel (%p18) target = $region8
    $region5: #{tpu_custom_call.1} parent=1 // loop_body
      %s22 = ssub.s32 %s17, 1
      %s23 = ssub.s32 %s17, 2
      %s30 = sadd.s32 1, %s25
      %p31 = scmp.ge.s32.totalorder %s30, 1
      %s32 = scalar_select %p31, 0, %s30
      %s33 = sadd.s32 1, %s24
      %s34 = scalar_select %p31, %s33, %s24
      %p35 = scmp.ge.s32.totalorder %s34, 2
      %s36 = scalar_select %p35, 0, %s34
      %s37 = sadd.s32 %s24, %s25
      %p38 = scmp.lt.s32.totalorder %s37, 0
      %s39 = scalar_select %p38, %s37, 0
      %s40 = sadd.s32 %s36, %s32
      %p41 = scmp.lt.s32.totalorder %s40, 0
      %s42 = scalar_select %p41, %s40, 0
      %s43 = ssub.s32 %s39, %s42
      %p44 = scmp.eq.s32.totalorder %s43, 0
      %s46 = sadd.s32 %s45, 1
      %s47 = scalar_select %p44, %s45, %s46
      %p50 = pneg %p44
      %p51 = scmp.eq.s32.totalorder %s17, 1
      %p52 = por %p50, %p51
      %p53 = scmp.ne.s32.totalorder %s45, %s48
      %p54 = scmp.eq.s32.totalorder %s17, 0
      %p55 = por %p53, %p54
      %p56 = scmp.ne.s32.totalorder %s45, %s48
      %p57 = scmp.eq.s32.totalorder %s22, 1
      %p58 = por %p56, %p57
      %p59 = scmp.ne.s32.totalorder %s48, %s49
      %p60 = scmp.eq.s32.totalorder %s22, 0
      %p61 = por %p59, %p60
      %p62 = scmp.ne.s32.totalorder %s48, %s49
      %p63 = scmp.eq.s32.totalorder %s23, 1
      %p64 = por %p62, %p63
      %p66 = scmp.ne.s32.totalorder %s49, %s65
      %p67 = scmp.eq.s32.totalorder %s23, 0
      %p68 = por %p66, %p67
      %s69 = sadd.s32 %s24, %s25
      %p70 = scmp.lt.s32.totalorder %s69, 0
      %s71 = scalar_select %p70, %s69, 0
      %s72 = sadd.s32 %s36, %s32
      %p73 = scmp.lt.s32.totalorder %s72, 0
      %s74 = scalar_select %p73, %s72, 0
      %s75 = ssub.s32 %s71, %s74
      %p76 = scmp.eq.s32.totalorder %s75, 0
      %s78 = sadd.s32 %s77, 1
      %s79 = scalar_select %p76, %s77, %s78
      %p82 = pneg %p76
      %p83 = scmp.eq.s32.totalorder %s17, 1
      %p84 = por %p82, %p83
      %p85 = scmp.ne.s32.totalorder %s77, %s80
      %p86 = scmp.eq.s32.totalorder %s17, 0
      %p87 = por %p85, %p86
      %p88 = scmp.ne.s32.totalorder %s77, %s80
      %p89 = scmp.eq.s32.totalorder %s22, 1
      %p90 = por %p88, %p89
      %p91 = scmp.ne.s32.totalorder %s80, %s81
      %p92 = scmp.eq.s32.totalorder %s22, 0
      %p93 = por %p91, %p92
      %p94 = scmp.ne.s32.totalorder %s80, %s81
      %p95 = scmp.eq.s32.totalorder %s23, 1
      %p96 = por %p94, %p95
      %p98 = scmp.ne.s32.totalorder %s81, %s97
      %p99 = scmp.eq.s32.totalorder %s23, 0
      %p100 = por %p98, %p99
      %s101 = ssub.s32 %s24, %s36
      %p102 = scmp.eq.s32.totalorder %s101, 0
      %s104 = sadd.s32 %s103, 1
      %s105 = scalar_select %p102, %s103, %s104
      %p108 = pneg %p102
      %p109 = scmp.eq.s32.totalorder %s17, 1
      %p110 = por %p108, %p109
      %p111 = scmp.ne.s32.totalorder %s103, %s106
      %p112 = scmp.eq.s32.totalorder %s17, 0
      %p113 = por %p111, %p112
      %p114 = scmp.ne.s32.totalorder %s103, %s106
      %p115 = scmp.eq.s32.totalorder %s22, 1
      %p116 = por %p114, %p115
      %p117 = scmp.ne.s32.totalorder %s106, %s107
      %p118 = scmp.eq.s32.totalorder %s22, 0
      %p119 = por %p117, %p118
      %p120 = scmp.ne.s32.totalorder %s106, %s107
      %p121 = scmp.eq.s32.totalorder %s23, 1
      %p122 = por %p120, %p121
      %p124 = scmp.ne.s32.totalorder %s107, %s123
      %p125 = scmp.eq.s32.totalorder %s23, 0
      %p126 = por %p124, %p125
      %p127 = scmp.le.s32.totalorder 1, %s17
      %p128 = scmp.lt.s32.totalorder %s17, 3
      %p129 = pnand %p127, %p128
      %p130 = pneg %p129
      // Predicated region
      $region9: #{tpu_custom_call.1} parent=5 // pred_check
        _
      $region10: #{tpu_custom_call.1} parent=5 // pred_check_branch
        %132 = sbr.rel (%p129) target = $region12
      $region11: #{tpu_custom_call.1} parent=5 // pred_region
        %s133 = ssub.s32 %s17, 1
      $region12: #{tpu_custom_call.1} parent=5 // pred_fallthru
        _
      %p134 = scmp.lt.s32.totalorder %s17, 2
      // Predicated region
      $region13: #{tpu_custom_call.1} parent=5 // pred_check
        %p135 = pneg %p134
      $region14: #{tpu_custom_call.1} parent=5 // pred_check_branch
        %137 = sbr.rel (%p135) target = $region16
      $region15: #{tpu_custom_call.1} parent=5 // pred_region
        // Predicated region
        $region17: #{tpu_custom_call.1} parent=15 // pred_check
          %p138 = pneg %p55
        $region18: #{tpu_custom_call.1} parent=15 // pred_check_branch
          %140 = sbr.rel (%p138) target = $region20
        $region19: #{tpu_custom_call.1} parent=15 // pred_region
          %s141 = sand.u32 %s45, 1
          %s142 = scalar_lea.sflag [#allocation3], %s141
          %s143 = sand.u32 %s45, 1
          %s144 = smul.addr %s143, 32
          %s145 = scalar_lea.vmem [#allocation2], %s144
          %s146 = sadd.s32 %s24, %s25
          %p147 = scmp.lt.s32.totalorder %s146, 0
          %s148 = scalar_select %p147, %s146, 0
          %s149 = smul.u32 4, %s148
          %s150 = ssub.s32 2, %s149
          %s151 = smul.u32 128, %s150
          %s153 = ssub.s32 512, %s151
          %154 = vsyncadd %s142, %s153
          %p155 = scmp.ne.s32.totalorder 0, %s151
          %s156 = smul.addr %s149, 128
          %s157 = scalar_lea.hbm %s0, %s156
          %s158 = smul.u32 8, %s150
          %s159 = sshll.u32 %s145, 4
          %s160 = int_to_ptr.vmem [resolvable:$true] %s159
          %s161 = sshll.u32 %s158, 4
          %165 = dma.hbm_to_vmem [thread:$0]  (%p155), %s157, %s161, %s160, %s142, 128, 128, 8
        $region20: #{tpu_custom_call.1} parent=15 // pred_fallthru
          _
        // Predicated region
        $region21: #{tpu_custom_call.1} parent=15 // pred_check
          %p166 = pneg %p87
        $region22: #{tpu_custom_call.1} parent=15 // pred_check_branch
          %168 = sbr.rel (%p166) target = $region24
        $region23: #{tpu_custom_call.1} parent=15 // pred_region
          %s169 = sand.u32 %s77, 1
          %s170 = scalar_lea.sflag [#allocation6], %s169
          %s171 = sand.u32 %s77, 1
          %s172 = smul.addr %s171, 32
          %s173 = scalar_lea.vmem [#allocation5], %s172
          %s174 = sadd.s32 %s24, %s25
          %p175 = scmp.lt.s32.totalorder %s174, 0
          %s176 = scalar_select %p175, %s174, 0
          %s177 = smul.u32 4, %s176
          %s178 = ssub.s32 2, %s177
          %s179 = smul.u32 128, %s178
          %s181 = ssub.s32 512, %s179
          %182 = vsyncadd %s170, %s181
          %p183 = scmp.ne.s32.totalorder 0, %s179
          %s184 = smul.addr %s177, 128
          %s185 = scalar_lea.hbm %s1, %s184
          %s186 = smul.u32 8, %s178
          %s187 = sshll.u32 %s173, 4
          %s188 = int_to_ptr.vmem [resolvable:$true] %s187
          %s189 = sshll.u32 %s186, 4
          %193 = dma.hbm_to_vmem [thread:$0]  (%p183), %s185, %s189, %s188, %s170, 128, 128, 8
        $region24: #{tpu_custom_call.1} parent=15 // pred_fallthru
          _
      $region16: #{tpu_custom_call.1} parent=5 // pred_fallthru
        _
      %p194 = scmp.le.s32.totalorder 1, %s17
      %p195 = scmp.lt.s32.totalorder %s17, 3
      %p196 = pnand %p194, %p195
      %p197 = pneg %p196
      // Predicated region
      $region25: #{tpu_custom_call.1} parent=5 // pred_check
        _
      $region26: #{tpu_custom_call.1} parent=5 // pred_check_branch
        %199 = sbr.rel (%p196) target = $region28
      $region27: #{tpu_custom_call.1} parent=5 // pred_region
        %s200 = ssub.s32 %s17, 1
        %s201 = sand.u32 %s48, 1
        %s202 = scalar_lea.sflag [#allocation3], %s201
        %s203 = sand.u32 %s48, 1
        %s204 = smul.addr %s203, 32
        %s205 = scalar_lea.vmem [#allocation2], %s204
        // Predicated region
        $region29: #{tpu_custom_call.1} parent=27 // pred_check
          %p206 = pneg %p61
        $region30: #{tpu_custom_call.1} parent=27 // pred_check_branch
          %208 = sbr.rel (%p206) target = $region32
        $region31: #{tpu_custom_call.1} parent=27 // pred_region
          %209 = dma.done %s202, 512
        $region32: #{tpu_custom_call.1} parent=27 // pred_fallthru
          _
        %s210 = sand.u32 %s80, 1
        %s211 = scalar_lea.sflag [#allocation6], %s210
        %s212 = sand.u32 %s80, 1
        %s213 = smul.addr %s212, 32
        %s214 = scalar_lea.vmem [#allocation5], %s213
        // Predicated region
        $region33: #{tpu_custom_call.1} parent=27 // pred_check
          %p215 = pneg %p93
        $region34: #{tpu_custom_call.1} parent=27 // pred_check_branch
          %217 = sbr.rel (%p215) target = $region36
        $region35: #{tpu_custom_call.1} parent=27 // pred_region
          %218 = dma.done %s211, 512
        $region36: #{tpu_custom_call.1} parent=27 // pred_fallthru
          _
        %s219 = sand.u32 %s48, 1
        %s220 = scalar_lea.sflag [#allocation3], %s219
        %s221 = sand.u32 %s48, 1
        %s222 = smul.addr %s221, 32
        %s223 = scalar_lea.vmem [#allocation2], %s222
        %p224 = pneg %p61
        %p225 = pneg %p58
        %s226 = sand.u32 %s80, 1
        %s227 = scalar_lea.sflag [#allocation6], %s226
        %s228 = sand.u32 %s80, 1
        %s229 = smul.addr %s228, 32
        %s230 = scalar_lea.vmem [#allocation5], %s229
        %p231 = pneg %p93
        %p232 = pneg %p90
        %p233 = pneg %p119
        %p234 = pneg %p116
        %s235 = sand.u32 %s106, 1
        %s236 = scalar_lea.sflag [#allocation4], %s235
        %s237 = sand.u32 %s106, 1
        %s238 = smul.addr %s237, 8
        %s239 = scalar_lea.vmem [#allocation7], %s238
        %s240 = sadd.s32 %s26, %s27
        %p241 = scmp.lt.s32.totalorder %s240, 0
        %s242 = scalar_select %p241, %s240, 0
        %s243 = smul.u32 4, %s242
        %s244 = ssub.s32 2, %s243
        %s245 = smul.u32 128, %s244
        %s246 = sadd.s32 %s26, %s27
        %p247 = scmp.lt.s32.totalorder %s246, 0
        %s248 = scalar_select %p247, %s246, 0
        %s249 = smul.u32 4, %s248
        %s250 = ssub.s32 2, %s249
        %s251 = smul.u32 128, %s250
        %p252 = scmp.eq.s32.totalorder %s27, 0
        // Predicated region
        $region37: #{tpu_custom_call.1} parent=27 // pred_check
          %p253 = pneg %p252
        $region38: #{tpu_custom_call.1} parent=27 // pred_check_branch
          %255 = sbr.rel (%p253) target = $region40
        $region39: #{tpu_custom_call.1} parent=27 // pred_region
          %256 = vst [vmem:[%s239] sm:$0xff] 0.0
        $region40: #{tpu_custom_call.1} parent=27 // pred_fallthru
          _
        %s257 = sadd.s32 %s26, %s27
        %s258 = smul.u32 %s257, 32
        %s259 = sadd.s32 %s258, 32
        %p260 = scmp.le.s32.totalorder %s259, 16
        // Predicated region
        $region41: #{tpu_custom_call.1} parent=27 // pred_check
          %p261 = pneg %p260
        $region42: #{tpu_custom_call.1} parent=27 // pred_check_branch
          %263 = sbr.rel (%p261) target = $region44
        $region43: #{tpu_custom_call.1} parent=27 // pred_region
          %v264 = vld [vmem:[%s205] sm:$0xff]
          %v265 = vld [vmem:[%s205 + $0x8] sm:$0xff]
          %v266 = vld [vmem:[%s205 + $0x10] sm:$0xff]
          %v267 = vld [vmem:[%s205 + $0x18] sm:$0xff]
          %v268 = vld [vmem:[%s214] sm:$0xff]
          %v269 = vld [vmem:[%s214 + $0x8] sm:$0xff]
          %v270 = vld [vmem:[%s214 + $0x10] sm:$0xff]
          %v271 = vld [vmem:[%s214 + $0x18] sm:$0xff]
          %v272 = vsub.f32 %v264, %v268
          %v273 = vsub.f32 %v265, %v269
          %v274 = vsub.f32 %v266, %v270
          %v275 = vsub.f32 %v267, %v271
          %v276 = vmul.f32 %v272, %v272
          %v277 = vmul.f32 %v273, %v273
          %v278 = vmul.f32 %v274, %v274
          %v279 = vmul.f32 %v275, %v275
          %v280 = vadd.f32 %v276, %v277
          %v281 = vadd.f32 %v280, %v278
          %v282 = vadd.f32 %v281, %v279
          %v283 = vld [vmem:[%s239] sm:$0xff]
          %v284 = vadd.f32 %v283, %v282
          %285 = vst [vmem:[%s239] sm:$0xff] %v284
        $region44: #{tpu_custom_call.1} parent=27 // pred_fallthru
          _
        %p286 = scmp.gt.s32.totalorder %s259, 16
        // Predicated region
        $region45: #{tpu_custom_call.1} parent=27 // pred_check
          %p287 = pneg %p286
        $region46: #{tpu_custom_call.1} parent=27 // pred_check_branch
          %289 = sbr.rel (%p287) target = $region48
        $region47: #{tpu_custom_call.1} parent=27 // pred_region
          %v290 = vld [vmem:[%s205] sm:$0xff]
          %v291 = vld [vmem:[%s205 + $0x8] sm:$0xff]
          %v292 = vld [vmem:[%s205 + $0x10] sm:$0xff]
          %v293 = vld [vmem:[%s205 + $0x18] sm:$0xff]
          %v294 = vld [vmem:[%s214] sm:$0xff]
          %v295 = vld [vmem:[%s214 + $0x8] sm:$0xff]
          %v296 = vld [vmem:[%s214 + $0x10] sm:$0xff]
          %v297 = vld [vmem:[%s214 + $0x18] sm:$0xff]
          %v298 = vsub.f32 %v290, %v294
          %v299 = vsub.f32 %v291, %v295
          %v300 = vsub.f32 %v292, %v296
          %v301 = vsub.f32 %v293, %v297
          %v302 = vmul.f32 %v298, %v298
          %v303 = vmul.f32 %v299, %v299
          %v304 = vmul.f32 %v300, %v300
          %v305 = vmul.f32 %v301, %v301
          %v306 = vlaneseq
          %v307 = vshrl.u32 %v306, 7
          %v308 = vadd.s32 %v307, 8
          %v309 = vadd.s32 %v307, 16
          %v310 = vadd.s32 %v307, 24
          %v311 = vstv %s258
          %v312 = vadd.s32 %v311, %v307
          %v313 = vadd.s32 %v311, %v308
          %v314 = vadd.s32 %v311, %v309
          %v315 = vadd.s32 %v311, %v310
          %vm316 = vcmp.lt.s32.totalorder %v312, 16
          %vm317 = vcmp.lt.s32.totalorder %v313, 16
          %vm318 = vcmp.lt.s32.totalorder %v314, 16
          %vm319 = vcmp.lt.s32.totalorder %v315, 16
          %v320 = vsel %vm316, %v302, 0.0
          %v321 = vsel %vm317, %v303, 0.0
          %v322 = vsel %vm318, %v304, 0.0
          %v323 = vsel %vm319, %v305, 0.0
          %v324 = vadd.f32 %v320, %v321
          %v325 = vadd.f32 %v324, %v322
          %v326 = vadd.f32 %v325, %v323
          %v327 = vld [vmem:[%s239] sm:$0xff]
          %v328 = vadd.f32 %v327, %v326
          %329 = vst [vmem:[%s239] sm:$0xff] %v328
        $region48: #{tpu_custom_call.1} parent=27 // pred_fallthru
          _
        %s330 = sand.u32 %s106, 1
        %s331 = scalar_lea.sflag [#allocation4], %s330
        %s332 = sand.u32 %s106, 1
        %s333 = smul.addr %s332, 8
        %s334 = scalar_lea.vmem [#allocation7], %s333
        // Predicated region
        $region49: #{tpu_custom_call.1} parent=27 // pred_check
          %p335 = pneg %p116
        $region50: #{tpu_custom_call.1} parent=27 // pred_check_branch
          %337 = sbr.rel (%p335) target = $region52
        $region51: #{tpu_custom_call.1} parent=27 // pred_region
          %s339 = ssub.s32 128, 128
          %340 = vsyncadd %s331, %s339
          %s341 = smul.addr %s26, 128
          %s342 = scalar_lea.hbm %s2, %s341
          %s344 = sshll.u32 %s334, 4
          %s345 = int_to_ptr.vmem [resolvable:$true] %s344
          %347 = dma.vmem_to_hbm [thread:$0]  %s345, 128, %s342, %s331
        $region52: #{tpu_custom_call.1} parent=27 // pred_fallthru
          _
      $region28: #{tpu_custom_call.1} parent=5 // pred_fallthru
        _
      %p348 = scmp.le.s32.totalorder 2, %s17
      // Predicated region
      $region53: #{tpu_custom_call.1} parent=5 // pred_check
        %p349 = pneg %p348
      $region54: #{tpu_custom_call.1} parent=5 // pred_check_branch
        %351 = sbr.rel (%p349) target = $region56
      $region55: #{tpu_custom_call.1} parent=5 // pred_region
        %s352 = ssub.s32 %s17, 2
        // Predicated region
        $region57: #{tpu_custom_call.1} parent=55 // pred_check
          %p353 = pneg %p122
        $region58: #{tpu_custom_call.1} parent=55 // pred_check_branch
          %355 = sbr.rel (%p353) target = $region60
        $region59: #{tpu_custom_call.1} parent=55 // pred_region
          %s356 = sand.u32 %s107, 1
          %s357 = scalar_lea.sflag [#allocation4], %s356
          %s358 = sand.u32 %s107, 1
          %s359 = smul.addr %s358, 8
          %s360 = scalar_lea.vmem [#allocation7], %s359
          %361 = dma.done %s357, 128
        $region60: #{tpu_custom_call.1} parent=55 // pred_fallthru
          _
      $region56: #{tpu_custom_call.1} parent=5 // pred_fallthru
        _
    $region6: #{tpu_custom_call.1} parent=1 // loop_footer
      %s21 = sadd.s32 1, %s17
    $region7: #{tpu_custom_call.1} parent=1 // loop_footer_branch
      %16 = sbr.rel target = $region3
    $region8: #{tpu_custom_call.1} parent=1 // loop_exit
      _
    %362 = vsyncpa [#allocation3], 1
    %s363 = scalar_lea.sflag [#allocation3], 1
    %364 = vsyncpa %s363, 1
    %365 = vsyncpa [#allocation6], 1
    %s366 = scalar_lea.sflag [#allocation6], 1
    %367 = vsyncpa %s366, 1
    %368 = vsyncpa [#allocation4], 1
    %s369 = scalar_lea.sflag [#allocation4], 1
    %370 = vsyncpa %s369, 1

</llo_original>
